<compile_context>
chip_gen: v7x
topology: tpu7x:2x2x1
jax: 0.10.0
libtpu: 0.0.40
codegen_flags: <defaults>
</compile_context>

<pallas_src>
import jax
import jax.numpy as jnp
from jax.experimental import pallas as pl
from jax.experimental.pallas import tpu as pltpu

NEG_SLOPE = 0.2  # nn.LeakyReLU(negative_slope=0.2)


def _f_pad(f_out):
    # Per-head padded width: room for the appended ones (rowsum) column at
    # index f_out, rounded up to a 128-lane multiple so per-head slices are
    # tile aligned.
    return max(128, ((f_out + 1 + 127) // 128) * 128)


def _bf16_scores_ok(device_kind):
    # bf16 score/exp math only where the VPU/EUP handle bf16 natively
    # (v6e / v7x and newer); keep f32 on v5e and older generations.
    k = device_kind.lower()
    return not any(t in k for t in ("v2", "v3", "v4", "v5"))


def _pick_tiles(n, device_kind=""):
    k = device_kind.lower()
    big_vmem_single_tc = ("v5" in k) or ("v6" in k)   # 128 MiB VMEM, 1 TC

    def pick(cands):
        for t in cands:
            if t <= n and n % t == 0:
                return t
        return n

    tq = pick([512, 256, 128] if big_vmem_single_tc else [256, 128])
    if not big_vmem_single_tc:
        # v7x: keep >= 2 query-row tiles so the "parallel" axis can span both
        # TensorCores.
        while tq > 128 and n // tq < 2 and tq % 2 == 0 and n % (tq // 2) == 0:
            tq //= 2
    tk = pick([512, 256, 128])
    return tq, tk


# ---------------------------------------------------------------------------
# Kernel 1a (diag=False): fused head-padded projection + attention scalars.
#   h_all = x @ W_all_pad (+ per-head ones column)   (N, H*F_pad)  bf16
#   s_all = h @ A_cat_pad                            (N, 128)      f32
# ---------------------------------------------------------------------------
def _make_proj_dense_kernel(f_out, f_pad):
    def kernel(x_ref, w_ref, a_ref, h_ref, s_ref):
        h = jnp.dot(x_ref[...], w_ref[...], preferred_element_type=jnp.float32)
        s_ref[...] = jnp.dot(h, a_ref[...], preferred_element_type=jnp.float32)
        lane = jax.lax.broadcasted_iota(jnp.int32, h.shape, 1)
        ones_col = ((lane % f_pad) == f_out).astype(jnp.float32)
        h_ref[...] = (h + ones_col).astype(h_ref.dtype)
    return kernel


# ---------------------------------------------------------------------------
# Kernel 1b (diag=True): elementwise per-head scale (no MXU for h), tiny MXU
# matmul only for the attention scalars.
# ---------------------------------------------------------------------------
def _make_proj_diag_kernel(n_head, f_out, f_pad):
    def kernel(x_ref, w_ref, a_ref, h_ref, s_ref):
        x = x_ref[...]                                        # (tr, F_pad) f32
        lane = jax.lax.broadcasted_iota(jnp.int32, x.shape, 1)
        ones_col = (lane == f_out).astype(jnp.float32)
        s = jnp.zeros(s_ref.shape, dtype=jnp.float32)
        for h in range(n_head):
            hh = x * w_ref[h:h + 1, :]                        # VPU broadcast mul
            s = s + jnp.dot(hh, a_ref[h], preferred_element_type=jnp.float32)
            h_ref[:, h * f_pad:(h + 1) * f_pad] = (hh + ones_col).astype(h_ref.dtype)
        s_ref[...] = s
    return kernel


# ---------------------------------------------------------------------------
# Kernel 2: tiled attention.  acc holds [numerator | rowsum | 0pad] per head;
# rowsum comes from the ones column of h_kv via the same MXU matmul.
# ---------------------------------------------------------------------------
def _make_attn_kernel(n_head, f_out, f_pad, use_bf16_scores, hkv_resident, tk):
    sdt = jnp.bfloat16 if use_bf16_scores else jnp.float32

    def kernel(nnz_ref, ssrc_ref, sdstT_ref, adj_ref, hkv_ref, o_ref, acc_ref):
        qi = pl.program_id(0)
        ki = pl.program_id(1)
        nk = pl.num_programs(1)

        @pl.when(ki == 0)
        def _init():
            acc_ref[...] = jnp.zeros_like(acc_ref)

        # Skip compute for tiles whose adjacency block is all-zero.
        @pl.when(nnz_ref[qi * nk + ki] > 0)
        def _compute():
            nz = adj_ref[...] != 0                            # (tq, tk) from int8
            if hkv_resident:
                row0 = pl.multiple_of(ki * tk, tk)
                hkv = hkv_ref[pl.ds(row0, tk), :]             # (tk, H*F_pad) bf16
            else:
                hkv = hkv_ref[...]
            ssrc = ssrc_ref[...].astype(sdt)                  # (tq, H)
            sdstT = sdstT_ref[...].astype(sdt)                # (H, tk)
            for h in range(n_head):
                s = ssrc[:, h:h + 1] + sdstT[h:h + 1, :]      # (tq, tk)
                # exp(-leaky_relu(s, 0.2)); negation folded into a single min.
                e = jnp.exp(jnp.minimum(-s, s * (-NEG_SLOPE)))
                e = jnp.where(nz, e, jnp.zeros_like(e)).astype(jnp.bfloat16)
                # e @ [h_head | 1 | 0pad] -> numerator + rowsum in one MXU call,
                # accumulated into a 128-aligned slice (no relayout, no concat).
                acc_ref[:, h * f_pad:(h + 1) * f_pad] += jnp.dot(
                    e, hkv[:, h * f_pad:(h + 1) * f_pad],
                    preferred_element_type=jnp.float32)

        @pl.when(ki == nk - 1)
        def _finalize():
            for h in range(n_head):
                blk = acc_ref[:, h * f_pad:(h + 1) * f_pad]   # (tq, F_pad)
                rs = blk[:, f_out:f_out + 1]                  # rowsum column
                inv = pl.reciprocal(rs, approx=True)
                inv = inv * (2.0 - rs * inv)                  # one Newton step
                o_ref[:, h * f_pad:(h + 1) * f_pad] = (blk * inv).astype(o_ref.dtype)

    return kernel


# ---------------------------------------------------------------------------
# Host-side parameter fusion into the head-padded layouts.
# ---------------------------------------------------------------------------
def _fuse_params(w, a, diag, f_pad):
    n_head, f_out = w.shape[0], w.shape[-1]
    assert 2 * n_head <= 128, "attention-scalar layout supports up to 64 heads"
    if diag:
        w_rows = jnp.zeros((n_head, f_pad), jnp.float32)
        a_blk = jnp.zeros((n_head, f_pad, 128), jnp.float32)
        for h in range(n_head):
            w_rows = w_rows.at[h, :f_out].set(w[h, 0])
            a_blk = a_blk.at[h, :f_out, h].set(a[h, 0, :f_out])
            a_blk = a_blk.at[h, :f_out, n_head + h].set(a[h, 0, f_out:])
        return w_rows, a_blk
    f_in = w.shape[1]
    hf = n_head * f_pad
    w_all = jnp.zeros((f_in, hf), jnp.float32)
    a_cat = jnp.zeros((hf, 128), jnp.float32)
    for h in range(n_head):
        w_all = w_all.at[:, h * f_pad:h * f_pad + f_out].set(w[h])
        a_cat = a_cat.at[h * f_pad:h * f_pad + f_out, h].set(a[h, 0, :f_out])
        a_cat = a_cat.at[h * f_pad:h * f_pad + f_out, n_head + h].set(a[h, 0, f_out:])
    return w_all, a_cat


# ---------------------------------------------------------------------------
# One MultiHeadGraphAttention layer.  Returns (N, n_head, f_out).
# ---------------------------------------------------------------------------
def multi_head_graph_attention(x, adj_i8, tile_nnz, w, a, diag, tq, tk,
                               use_bf16_scores):
    n, f_in = x.shape
    n_head, f_out = w.shape[0], w.shape[-1]
    f_pad = _f_pad(f_out)
    hf = n_head * f_pad
    tr = tq

    proj_out_shape = (jax.ShapeDtypeStruct((n, hf), jnp.bfloat16),
                      jax.ShapeDtypeStruct((n, 128), jnp.float32))
    proj_out_specs = [pl.BlockSpec((tr, hf), lambda r: (r, 0)),
                      pl.BlockSpec((tr, 128), lambda r: (r, 0))]

    if diag:
        assert f_in == f_out, "diag GAT layer requires f_in == f_out"
        w_rows, a_blk = _fuse_params(w, a, True, f_pad)
        x_pad = jnp.pad(x, ((0, 0), (0, f_pad - f_in)))
        h_all, s_all = pl.pallas_call(
            _make_proj_diag_kernel(n_head, f_out, f_pad),
            out_shape=proj_out_shape,
            grid=(n // tr,),
            in_specs=[pl.BlockSpec((tr, f_pad), lambda r: (r, 0)),
                      pl.BlockSpec((n_head, f_pad), lambda r: (0, 0)),
                      pl.BlockSpec((n_head, f_pad, 128), lambda r: (0, 0, 0))],
            out_specs=proj_out_specs,
            compiler_params=pltpu.CompilerParams(
                dimension_semantics=("parallel",)),
        )(x_pad, w_rows, a_blk)
    else:
        w_all, a_cat = _fuse_params(w, a, False, f_pad)
        h_all, s_all = pl.pallas_call(
            _make_proj_dense_kernel(f_out, f_pad),
            out_shape=proj_out_shape,
            grid=(n // tr,),
            in_specs=[pl.BlockSpec((tr, f_in), lambda r: (r, 0)),
                      pl.BlockSpec((f_in, hf), lambda r: (0, 0)),
                      pl.BlockSpec((hf, 128), lambda r: (0, 0))],
            out_specs=proj_out_specs,
            compiler_params=pltpu.CompilerParams(
                dimension_semantics=("parallel",)),
        )(x, w_all, a_cat)

    s_src = s_all[:, :n_head]                              # (N, H)
    s_dst_t = jnp.transpose(s_all[:, n_head:2 * n_head])  # (H, N) lane-dense

    nq, nk = n // tq, n // tk

    # h_kv resident in VMEM when small enough (DMA'd once instead of once per
    # query-row tile); otherwise stream (tk, hf) blocks.
    hkv_resident = (n * hf * 2) <= (6 << 20)
    if hkv_resident:
        hkv_spec = pl.BlockSpec((n, hf), lambda qi, ki, nnz: (0, 0))
    else:
        hkv_spec = pl.BlockSpec((tk, hf), lambda qi, ki, nnz: (ki, 0))

    # VMEM working-set estimate (double-buffered inputs/output + accumulator
    # + per-head f32/bf16 score/exp temporaries) -> scoped VMEM limit, clamped
    # to 64 MiB so it stays within v7x's physical VMEM.
    est = (2 * tq * tk
           + (2 * n * hf * 2 if hkv_resident else 2 * tk * hf * 2)
           + 2 * tq * 128 * 4 + 2 * 8 * tk * 4
           + 2 * tq * hf * 4 + tq * hf * 4
           + 4 * tq * tk * 4)
    vmem_limit = int(min(64 << 20, max(32 << 20, 2 * est)))

    out = pl.pallas_call(
        _make_attn_kernel(n_head, f_out, f_pad, use_bf16_scores,
                          hkv_resident, tk),
        out_shape=jax.ShapeDtypeStruct((n, hf), jnp.float32),
        grid_spec=pltpu.PrefetchScalarGridSpec(
            num_scalar_prefetch=1,
            grid=(nq, nk),
            in_specs=[
                pl.BlockSpec((tq, n_head), lambda qi, ki, nnz: (qi, 0)),   # s_src
                pl.BlockSpec((n_head, tk), lambda qi, ki, nnz: (0, ki)),   # s_dst^T
                pl.BlockSpec((tq, tk), lambda qi, ki, nnz: (qi, ki)),      # adj int8
                hkv_spec,                                                  # h_kv bf16
            ],
            out_specs=pl.BlockSpec((tq, hf), lambda qi, ki, nnz: (qi, 0)),
            scratch_shapes=[pltpu.VMEM((tq, hf), jnp.float32)],            # acc
        ),
        compiler_params=pltpu.CompilerParams(
            dimension_semantics=("parallel", "arbitrary"),
            vmem_limit_bytes=vmem_limit),
    )(tile_nnz, s_src, s_dst_t, adj_i8, h_all)

    # Strip per-head padding (rowsum column + lane padding) in the wrapper.
    return out.reshape(n, n_head, f_pad)[:, :, :f_out]


# ---------------------------------------------------------------------------
# GAT forward (eval mode): mirrors GAT.forward exactly.
# ---------------------------------------------------------------------------
def gat_forward(x, adj, layer_params, diag, tq=None, tk=None):
    n = adj.shape[0]
    try:
        kind = jax.devices()[0].device_kind
    except Exception:
        kind = ""
    use_bf16_scores = _bf16_scores_ok(kind)
    tq0, tk0 = _pick_tiles(n, kind)
    tq = tq0 if tq is None else tq
    tk = tk0 if tk is None else tk
    assert n % tq == 0 and n % tk == 0

    adj_i8 = (adj != 0).astype(jnp.int8)       # mask stream: 4x less HBM than f32
    nq, nk = n // tq, n // tk
    tile_nnz = jnp.any(adj_i8.reshape(nq, tq, nk, tk) != 0, axis=(1, 3))
    tile_nnz = tile_nnz.astype(jnp.int32).reshape(-1)   # flat (nq*nk,) for SMEM

    num_layer = len(layer_params)
    for i, (w, a) in enumerate(layer_params):
        n_head, f_out = w.shape[0], w.shape[-1]
        # F.dropout(x, p, training=False) -> no-op (eval mode)
        out = multi_head_graph_attention(x, adj_i8, tile_nnz, w, a, diag,
                                         tq, tk, use_bf16_scores)   # (n, H, f_out)
        if diag:
            x = jnp.mean(out, axis=1)                                # x.mean(dim=0)
            if i + 1 < num_layer:
                x = jax.nn.elu(x)
        else:
            if i + 1 < num_layer:
                x = jax.nn.elu(out.reshape(n, n_head * f_out))       # head concat
            else:
                x = jnp.mean(out, axis=1)
    return x


# ---------------------------------------------------------------------------
# Deterministic parameter init (matches module __init__ shapes).
# ---------------------------------------------------------------------------
def init_gat_params(key, n_units, n_heads, diag):
    num_layer = len(n_units) - 1
    params = []
    for i in range(num_layer):
        f_in = n_units[i] * n_heads[i - 1] if i else n_units[i]
        f_out = n_units[i + 1]
        nh = n_heads[i]
        key, kw, ka = jax.random.split(key, 3)
        if diag:
            w = jnp.ones((nh, 1, f_out), jnp.float32)              # nn.init.ones_
        else:
            bound = (6.0 / (f_in + f_out)) ** 0.5                  # xavier_uniform
            w = jax.random.uniform(kw, (nh, f_in, f_out), jnp.float32, -bound, bound)
        stdv = 1.0 / (2.0 * f_out) ** 0.5                          # uniform(-stdv, stdv)
        a = jax.random.uniform(ka, (nh, 1, 2 * f_out), jnp.float32, -stdv, stdv)
        params.append((w, a))
    return params


# ---------------------------------------------------------------------------
# Pure-JAX (f32) reference for correctness checking.
# ---------------------------------------------------------------------------
def _mhga_reference(x, adj, w, a, diag):
    f_out = w.shape[-1]
    outs = []
    for i in range(w.shape[0]):
        h = x * w[i] if diag else x @ w[i]
        s_src = h @ a[i, 0, :f_out]
        s_dst = h @ a[i, 0, f_out:]
        scores = s_src[:, None] + s_dst[None, :]
        lrelu = jnp.where(scores >= 0, scores, NEG_SLOPE * scores)
        e = adj * jnp.exp(-lrelu)
        outs.append((e @ h) / jnp.sum(e, axis=1, keepdims=True))
    return jnp.stack(outs, 0)


def gat_reference(x, adj, layer_params, diag):
    num_layer = len(layer_params)
    n = adj.shape[0]
    for i, (w, a) in enumerate(layer_params):
        x = _mhga_reference(x, adj, w, a, diag)
        if diag:
            x = jnp.mean(x, axis=0)
        if i + 1 < num_layer:
            if diag:
                x = jax.nn.elu(x)
            else:
                nh, _, f = x.shape
                x = jax.nn.elu(jnp.transpose(x, (1, 0, 2)).reshape(n, nh * f))
    if not diag:
        x = jnp.mean(x, axis=0)
    return x


if __name__ == "__main__":
    key = jax.random.PRNGKey(0)
    N = 256
    k_x, k_adj, k_p1, k_p2 = jax.random.split(key, 4)

    # Random symmetric adjacency with self-loops (avoids empty rows).
    adj = (jax.random.uniform(k_adj, (N, N)) < 0.08).astype(jnp.float32)
    adj = jnp.maximum(adj, adj.T)
    adj = jnp.maximum(adj, jnp.eye(N, dtype=jnp.float32))

    # Tolerances cover bf16 h / e (and bf16 score+exp on v6e/v7x); scores,
    # accumulation and normalization stay f32.
    ATOL = RTOL = 3e-2

    # --- Config 1: diag=True (elementwise per-head transform), default tiles ---
    n_units, n_heads = [64, 64, 64], [2, 2]
    x = jax.random.normal(k_x, (N, n_units[0]), jnp.float32)
    params = init_gat_params(k_p1, n_units, n_heads, diag=True)
    out = gat_forward(x, adj, params, diag=True)
    jax.block_until_ready(out)
    ref = gat_reference(x, adj, params, diag=True)
    assert out.shape == (N, n_units[-1])
    assert bool(jnp.allclose(out, ref, atol=ATOL, rtol=RTOL)), "diag=True mismatch"

    # --- Config 2: diag=False (dense per-head projection, head concat) ---
    # Explicit 128x128 tiles -> 2x2 grid exercises the streaming kv
    # accumulation, the resident-h_kv row slicing and the tile-skip path.
    n_units2, n_heads2 = [64, 32, 32], [2, 2]
    x2 = jax.random.normal(k_x, (N, n_units2[0]), jnp.float32)
    params2 = init_gat_params(k_p2, n_units2, n_heads2, diag=False)
    out2 = gat_forward(x2, adj, params2, diag=False, tq=128, tk=128)
    jax.block_until_ready(out2)
    ref2 = gat_reference(x2, adj, params2, diag=False)
    assert out2.shape == (N, n_units2[-1])
    assert bool(jnp.allclose(out2, ref2, atol=ATOL, rtol=RTOL)), "diag=False mismatch"

    print("KERNEL_OK")
</pallas_src>

<mosaic_0001>
module attributes {stable_mosaic.version = 11 : i64} {
  func.func @kernel(%arg0: i32, %arg1: memref<128x128xf32, #tpu.memory_space<vmem>>, %arg2: memref<2x128xf32, #tpu.memory_space<vmem>>, %arg3: memref<2x128x128xf32, #tpu.memory_space<vmem>>, %arg4: memref<128x256xbf16, #tpu.memory_space<vmem>>, %arg5: memref<128x128xf32, #tpu.memory_space<vmem>>) attributes {dimension_semantics = [#tpu.dimension_semantics<parallel>], iteration_bounds = array<i64: 2>, scalar_prefetch = 0 : i64, scratch_operands = 0 : i64, tpu.core_type = #tpu.core_type<tc>, window_params = [{transform_indices = @transform_0, window_bounds = array<i64: 128, 128>}, {pipeline_mode = #tpu.pipeline_mode<synchronous>, transform_indices = @transform_1, window_bounds = array<i64: 2, 128>}, {pipeline_mode = #tpu.pipeline_mode<synchronous>, transform_indices = @transform_2, window_bounds = array<i64: 2, 128, 128>}, {transform_indices = @transform_3, window_bounds = array<i64: 128, 256>}, {transform_indices = @transform_4, window_bounds = array<i64: 128, 128>}]} {
    %c0 = arith.constant 0 : index
    %c0_0 = arith.constant 0 : index
    %0 = vector.load %arg1[%c0, %c0_0] : memref<128x128xf32, #tpu.memory_space<vmem>>, vector<128x128xf32>
    %1 = tpu.iota {dimensions = array<i32: 1>} : vector<128x128xi32>
    %c64_i32 = arith.constant 64 : i32
    %2 = vector.broadcast %c64_i32 : i32 to vector<128x128xi32>
    %3 = arith.cmpi eq, %1, %2 : vector<128x128xi32>
    %4 = arith.extui %3 : vector<128x128xi1> to vector<128x128xi32>
    %5 = arith.sitofp %4 : vector<128x128xi32> to vector<128x128xf32>
    %cst = arith.constant 0.000000e+00 : f32
    %6 = vector.broadcast %cst : f32 to vector<128x128xf32>
    %c0_1 = arith.constant 0 : index
    %c0_2 = arith.constant 0 : index
    %7 = vector.load %arg2[%c0_1, %c0_2] : memref<2x128xf32, #tpu.memory_space<vmem>>, vector<1x128xf32>
    %8 = vector.broadcast %7 : vector<1x128xf32> to vector<128x128xf32>
    %9 = arith.mulf %0, %8 : vector<128x128xf32>
    %c0_3 = arith.constant 0 : index
    %c0_4 = arith.constant 0 : index
    %c0_5 = arith.constant 0 : index
    %10 = vector.load %arg3[%c0_3, %c0_4, %c0_5] : memref<2x128x128xf32, #tpu.memory_space<vmem>>, vector<1x128x128xf32>
    %11 = vector.shape_cast %10 : vector<1x128x128xf32> to vector<128x128xf32>
    %cst_6 = arith.constant dense<0.000000e+00> : vector<128x128xf32>
    %12 = tpu.matmul %9, %11, %cst_6 {dimension_numbers = #tpu.dot_dimension_numbers<[1], [0], [0], [1], [0, 0, 1, 1], [], []>} : vector<128x128xf32>, vector<128x128xf32>, vector<128x128xf32> -> vector<128x128xf32>
    %13 = arith.addf %6, %12 : vector<128x128xf32>
    %14 = arith.addf %9, %5 : vector<128x128xf32>
    %15 = arith.truncf %14 : vector<128x128xf32> to vector<128x128xbf16>
    %c0_7 = arith.constant 0 : index
    %c0_8 = arith.constant 0 : index
    %16 = vector.load %arg4[%c0_7, %c0_8] : memref<128x256xbf16, #tpu.memory_space<vmem>>, vector<128x128xbf16>
    tpu.vector_store %arg4[%c0_7, %c0_8], %15 {strides = array<i32>} : memref<128x256xbf16, #tpu.memory_space<vmem>>, vector<128x128xbf16>,
    %c1 = arith.constant 1 : index
    %c0_9 = arith.constant 0 : index
    %17 = vector.load %arg2[%c1, %c0_9] : memref<2x128xf32, #tpu.memory_space<vmem>>, vector<1x128xf32>
    %18 = vector.broadcast %17 : vector<1x128xf32> to vector<128x128xf32>
    %19 = arith.mulf %0, %18 : vector<128x128xf32>
    %c1_10 = arith.constant 1 : index
    %c0_11 = arith.constant 0 : index
    %c0_12 = arith.constant 0 : index
    %20 = vector.load %arg3[%c1_10, %c0_11, %c0_12] : memref<2x128x128xf32, #tpu.memory_space<vmem>>, vector<1x128x128xf32>
    %21 = vector.shape_cast %20 : vector<1x128x128xf32> to vector<128x128xf32>
    %cst_13 = arith.constant dense<0.000000e+00> : vector<128x128xf32>
    %22 = tpu.matmul %19, %21, %cst_13 {dimension_numbers = #tpu.dot_dimension_numbers<[1], [0], [0], [1], [0, 0, 1, 1], [], []>} : vector<128x128xf32>, vector<128x128xf32>, vector<128x128xf32> -> vector<128x128xf32>
    %23 = arith.addf %13, %22 : vector<128x128xf32>
    %24 = arith.addf %19, %5 : vector<128x128xf32>
    %25 = arith.truncf %24 : vector<128x128xf32> to vector<128x128xbf16>
    %c0_14 = arith.constant 0 : index
    %c128 = arith.constant 128 : index
    %26 = vector.load %arg4[%c0_14, %c128] : memref<128x256xbf16, #tpu.memory_space<vmem>>, vector<128x128xbf16>
    tpu.vector_store %arg4[%c0_14, %c128], %25 {strides = array<i32>} : memref<128x256xbf16, #tpu.memory_space<vmem>>, vector<128x128xbf16>,
    %c0_15 = arith.constant 0 : index
    %c0_16 = arith.constant 0 : index
    %27 = vector.load %arg5[%c0_15, %c0_16] : memref<128x128xf32, #tpu.memory_space<vmem>>, vector<128x128xf32>
    tpu.vector_store %arg5[%c0_15, %c0_16], %23 {strides = array<i32>} : memref<128x128xf32, #tpu.memory_space<vmem>>, vector<128x128xf32>,
    return
  }
  func.func @transform_0(%arg0: i32) -> (i32, i32) {
    %c0_i32 = arith.constant 0 : i32
    %c0_i32_0 = arith.constant 0 : i32
    return %arg0, %c0_i32 : i32, i32
  }
  func.func @transform_1(%arg0: i32) -> (i32, i32) {
    %c0_i32 = arith.constant 0 : i32
    %c0_i32_0 = arith.constant 0 : i32
    %c0_i32_1 = arith.constant 0 : i32
    return %c0_i32, %c0_i32_0 : i32, i32
  }
  func.func @transform_2(%arg0: i32) -> (i32, i32, i32) {
    %c0_i32 = arith.constant 0 : i32
    %c0_i32_0 = arith.constant 0 : i32
    %c0_i32_1 = arith.constant 0 : i32
    %c0_i32_2 = arith.constant 0 : i32
    return %c0_i32, %c0_i32_0, %c0_i32_1 : i32, i32, i32
  }
  func.func @transform_3(%arg0: i32) -> (i32, i32) {
    %c0_i32 = arith.constant 0 : i32
    %c0_i32_0 = arith.constant 0 : i32
    return %arg0, %c0_i32 : i32, i32
  }
  func.func @transform_4(%arg0: i32) -> (i32, i32) {
    %c0_i32 = arith.constant 0 : i32
    %c0_i32_0 = arith.constant 0 : i32
    return %arg0, %c0_i32 : i32, i32
  }
}

</mosaic_0001>

<llo_original>
// kernel: tpu_custom_call.1
$region0: #{tpu_custom_call.1}
  #allocation0 [shape = 'u32[]', space=smem, size = 0x4, offset = 0x4, fixed_abs, tag = 'smem constant byte address 0x4 - core index']
  #allocation1 [shape = 'u32[144,128]{1,0:T(1,128)}', space=vmem, size = 0x12000, scoped, tag = 'internal scratch']
  %s0 = inlined_call_operand.hbm [shape: f32[256,128], index: 0, kind: input, shape index: {}]
  %s1 = inlined_call_operand.vmem [shape: f32[2,128], index: 1, kind: input, shape index: {}]
  %s2 = inlined_call_operand.hbm [shape: f32[2,128,128], index: 2, kind: input, shape index: {}]
  %s3 = inlined_call_operand.hbm [shape: bf16[256,256], index: 3, kind: output, shape index: {0}]
  %s4 = inlined_call_operand.hbm [shape: f32[256,128], index: 4, kind: output, shape index: {1}]
  %5 = xla_tuple %s3, %s4
  %s6 = sld [smem:[#allocation0]]
  $region61: #{tpu_custom_call.1} parent=0
    _
  %s8 = ssub.s32 1, %s6
  %s9 = scalar_select 0, %s8, %s6
  $region1: #{tpu_custom_call.1} parent=0
    #allocation2 [shape = 'u8[131072]{0}', space=vmem, size = 0x20000, scoped, tag = 'input window, operand 0']
    #allocation3 [shape = 's32[2]{0}', space=sflag, size = 0x8, scoped, tag = 'scoped memory for tpu_custom_call.1']
    #allocation4 [shape = 's32[2]{0}', space=sflag, size = 0x8, scoped, tag = 'scoped memory for tpu_custom_call.1']
    #allocation5 [shape = 'u8[131072]{0}', space=vmem, size = 0x20000, scoped, tag = 'input window, operand 2, single buffered']
    #allocation6 [shape = 's32[1]{0}', space=sflag, size = 0x4, scoped, tag = 'scoped memory for tpu_custom_call.1']
    #allocation7 [shape = 'u8[131072]{0}', space=vmem, size = 0x20000, scoped, tag = 'output window, operand 0']
    #allocation8 [shape = 'u8[131072]{0}', space=vmem, size = 0x20000, scoped, tag = 'output window, operand 1']
    #allocation9 [shape = 's32[2]{0}', space=sflag, size = 0x8, scoped, tag = 'scoped memory for tpu_custom_call.1']
    %10 = vsyncpa [#allocation3], 0
    %s11 = scalar_lea.sflag [#allocation3], 1
    %12 = vsyncpa %s11, 0
    %13 = vsyncpa [#allocation6], 0
    %14 = vsyncpa [#allocation4], 0
    %s15 = scalar_lea.sflag [#allocation4], 1
    %16 = vsyncpa %s15, 0
    %17 = vsyncpa [#allocation9], 0
    %s18 = scalar_lea.sflag [#allocation9], 1
    %19 = vsyncpa %s18, 0
    loop: start=0, step=1, limit=4
    $region2: #{tpu_custom_call.1} parent=1 // loop_pre_header
      _
    $region3: #{tpu_custom_call.1} parent=1 // loop_header
      %s21 = sphi 0, %s25
      %p22 = scmp.ge.s32.totalorder %s21, 4
      %s31 = sphi 0, %s33
      %s34 = sphi 0, %s31
      %s35 = sphi 0, %s34
      %s51 = sphi 0, %s35
      %s55 = sphi 0, %s55
      %s57 = sphi 0, %s55
      %s58 = sphi 0, %s57
      %s72 = sphi 0, %s58
      %s76 = sphi 0, %s76
      %s78 = sphi 0, %s76
      %s79 = sphi 0, %s78
      %s93 = sphi 0, %s79
      %s99 = sphi 0, %s101
      %s102 = sphi 0, %s99
      %s103 = sphi 0, %s102
      %s119 = sphi 0, %s103
      %s125 = sphi 0, %s127
      %s128 = sphi 0, %s125
      %s129 = sphi 0, %s128
      %s145 = sphi 0, %s129
    $region4: #{tpu_custom_call.1} parent=1 // loop_header_branch
      %24 = sbr.rel (%p22) target = $region8
    $region5: #{tpu_custom_call.1} parent=1 // loop_body
      %s26 = ssub.s32 %s21, 1
      %s27 = ssub.s32 %s21, 2
      %s28 = sadd.s32 %s21, 1
      %s29 = ssub.s32 %s21, %s28
      %p30 = scmp.eq.s32.totalorder %s29, 0
      %s32 = sadd.s32 %s31, 1
      %s33 = scalar_select %p30, %s31, %s32
      %p36 = pneg %p30
      %p37 = scmp.eq.s32.totalorder %s21, 1
      %p38 = por %p36, %p37
      %p39 = scmp.ne.s32.totalorder %s31, %s34
      %p40 = scmp.eq.s32.totalorder %s21, 0
      %p41 = por %p39, %p40
      %p42 = scmp.ne.s32.totalorder %s31, %s34
      %p43 = scmp.eq.s32.totalorder %s26, 1
      %p44 = por %p42, %p43
      %p45 = scmp.ne.s32.totalorder %s34, %s35
      %p46 = scmp.eq.s32.totalorder %s26, 0
      %p47 = por %p45, %p46
      %p48 = scmp.ne.s32.totalorder %s34, %s35
      %p49 = scmp.eq.s32.totalorder %s27, 1
      %p50 = por %p48, %p49
      %p52 = scmp.ne.s32.totalorder %s35, %s51
      %p53 = scmp.eq.s32.totalorder %s27, 0
      %p54 = por %p52, %p53
      %s56 = sadd.s32 %s55, 1
      %p59 = scmp.eq.s32.totalorder %s21, 1
      %p60 = scmp.ne.s32.totalorder %s55, %s57
      %p61 = scmp.eq.s32.totalorder %s21, 0
      %p62 = por %p60, %p61
      %p63 = scmp.ne.s32.totalorder %s55, %s57
      %p64 = scmp.eq.s32.totalorder %s26, 1
      %p65 = por %p63, %p64
      %p66 = scmp.ne.s32.totalorder %s57, %s58
      %p67 = scmp.eq.s32.totalorder %s26, 0
      %p68 = por %p66, %p67
      %p69 = scmp.ne.s32.totalorder %s57, %s58
      %p70 = scmp.eq.s32.totalorder %s27, 1
      %p71 = por %p69, %p70
      %p73 = scmp.ne.s32.totalorder %s58, %s72
      %p74 = scmp.eq.s32.totalorder %s27, 0
      %p75 = por %p73, %p74
      %s77 = sadd.s32 %s76, 1
      %p80 = scmp.eq.s32.totalorder %s21, 1
      %p81 = scmp.ne.s32.totalorder %s76, %s78
      %p82 = scmp.eq.s32.totalorder %s21, 0
      %p83 = por %p81, %p82
      %p84 = scmp.ne.s32.totalorder %s76, %s78
      %p85 = scmp.eq.s32.totalorder %s26, 1
      %p86 = por %p84, %p85
      %p87 = scmp.ne.s32.totalorder %s78, %s79
      %p88 = scmp.eq.s32.totalorder %s26, 0
      %p89 = por %p87, %p88
      %p90 = scmp.ne.s32.totalorder %s78, %s79
      %p91 = scmp.eq.s32.totalorder %s27, 1
      %p92 = por %p90, %p91
      %p94 = scmp.ne.s32.totalorder %s79, %s93
      %p95 = scmp.eq.s32.totalorder %s27, 0
      %p96 = por %p94, %p95
      %s97 = ssub.s32 %s21, %s28
      %p98 = scmp.eq.s32.totalorder %s97, 0
      %s100 = sadd.s32 %s99, 1
      %s101 = scalar_select %p98, %s99, %s100
      %p104 = pneg %p98
      %p105 = scmp.eq.s32.totalorder %s21, 1
      %p106 = por %p104, %p105
      %p107 = scmp.ne.s32.totalorder %s99, %s102
      %p108 = scmp.eq.s32.totalorder %s21, 0
      %p109 = por %p107, %p108
      %p110 = scmp.ne.s32.totalorder %s99, %s102
      %p111 = scmp.eq.s32.totalorder %s26, 1
      %p112 = por %p110, %p111
      %p113 = scmp.ne.s32.totalorder %s102, %s103
      %p114 = scmp.eq.s32.totalorder %s26, 0
      %p115 = por %p113, %p114
      %p116 = scmp.ne.s32.totalorder %s102, %s103
      %p117 = scmp.eq.s32.totalorder %s27, 1
      %p118 = por %p116, %p117
      %p120 = scmp.ne.s32.totalorder %s103, %s119
      %p121 = scmp.eq.s32.totalorder %s27, 0
      %p122 = por %p120, %p121
      %s123 = ssub.s32 %s21, %s28
      %p124 = scmp.eq.s32.totalorder %s123, 0
      %s126 = sadd.s32 %s125, 1
      %s127 = scalar_select %p124, %s125, %s126
      %p130 = pneg %p124
      %p131 = scmp.eq.s32.totalorder %s21, 1
      %p132 = por %p130, %p131
      %p133 = scmp.ne.s32.totalorder %s125, %s128
      %p134 = scmp.eq.s32.totalorder %s21, 0
      %p135 = por %p133, %p134
      %p136 = scmp.ne.s32.totalorder %s125, %s128
      %p137 = scmp.eq.s32.totalorder %s26, 1
      %p138 = por %p136, %p137
      %p139 = scmp.ne.s32.totalorder %s128, %s129
      %p140 = scmp.eq.s32.totalorder %s26, 0
      %p141 = por %p139, %p140
      %p142 = scmp.ne.s32.totalorder %s128, %s129
      %p143 = scmp.eq.s32.totalorder %s27, 1
      %p144 = por %p142, %p143
      %p146 = scmp.ne.s32.totalorder %s129, %s145
      %p147 = scmp.eq.s32.totalorder %s27, 0
      %p148 = por %p146, %p147
      %p149 = scmp.le.s32.totalorder 1, %s21
      %p150 = scmp.lt.s32.totalorder %s21, 3
      %p151 = pnand %p149, %p150
      %p152 = pneg %p151
      // Predicated region
      $region9: #{tpu_custom_call.1} parent=5 // pred_check
        _
      $region10: #{tpu_custom_call.1} parent=5 // pred_check_branch
        %154 = sbr.rel (%p151) target = $region12
      $region11: #{tpu_custom_call.1} parent=5 // pred_region
        %s155 = ssub.s32 %s21, 1
        // Predicated region
        $region13: #{tpu_custom_call.1} parent=11 // pred_check
          %p156 = pneg %p68
        $region14: #{tpu_custom_call.1} parent=11 // pred_check_branch
          %158 = sbr.rel (%p156) target = $region16
        $region15: #{tpu_custom_call.1} parent=11 // pred_region
          _
        $region16: #{tpu_custom_call.1} parent=11 // pred_fallthru
          _
        // Predicated region
        $region17: #{tpu_custom_call.1} parent=11 // pred_check
          %p159 = pneg %p89
        $region18: #{tpu_custom_call.1} parent=11 // pred_check_branch
          %161 = sbr.rel (%p159) target = $region20
        $region19: #{tpu_custom_call.1} parent=11 // pred_region
          %s163 = ssub.s32 4096, 4096
          %164 = vsyncadd [#allocation6], %s163
          %s165 = sshll.u32 [#allocation5], 4
          %s166 = int_to_ptr.vmem [resolvable:$true] %s165
          %171 = dma.hbm_to_vmem [thread:$0]  %s2, 4096, %s166, [#allocation6], 128, 128, 8
        $region20: #{tpu_custom_call.1} parent=11 // pred_fallthru
          _
      $region12: #{tpu_custom_call.1} parent=5 // pred_fallthru
        _
      %p172 = scmp.lt.s32.totalorder %s21, 2
      // Predicated region
      $region21: #{tpu_custom_call.1} parent=5 // pred_check
        %p173 = pneg %p172
      $region22: #{tpu_custom_call.1} parent=5 // pred_check_branch
        %175 = sbr.rel (%p173) target = $region24
      $region23: #{tpu_custom_call.1} parent=5 // pred_region
        // Predicated region
        $region25: #{tpu_custom_call.1} parent=23 // pred_check
          %p176 = pneg %p41
        $region26: #{tpu_custom_call.1} parent=23 // pred_check_branch
          %178 = sbr.rel (%p176) target = $region28
        $region27: #{tpu_custom_call.1} parent=23 // pred_region
          %s179 = sand.u32 %s31, 1
          %s180 = scalar_lea.sflag [#allocation3], %s179
          %s181 = sand.u32 %s31, 1
          %s182 = smul.addr %s181, 128
          %s183 = scalar_lea.vmem [#allocation2], %s182
          %s184 = smul.u32 16, %s21
          %s186 = ssub.s32 2048, 2048
          %187 = vsyncadd %s180, %s186
          %s188 = smul.addr %s184, 128
          %s189 = scalar_lea.hbm %s0, %s188
          %s190 = sshll.u32 %s183, 4
          %s191 = int_to_ptr.vmem [resolvable:$true] %s190
          %196 = dma.hbm_to_vmem [thread:$0]  %s189, 2048, %s191, %s180, 128, 128, 8
        $region28: #{tpu_custom_call.1} parent=23 // pred_fallthru
          _
      $region24: #{tpu_custom_call.1} parent=5 // pred_fallthru
        _
      %p197 = scmp.le.s32.totalorder 1, %s21
      %p198 = scmp.lt.s32.totalorder %s21, 3
      %p199 = pnand %p197, %p198
      %p200 = pneg %p199
      // Predicated region
      $region29: #{tpu_custom_call.1} parent=5 // pred_check
        _
      $region30: #{tpu_custom_call.1} parent=5 // pred_check_branch
        %202 = sbr.rel (%p199) target = $region32
      $region31: #{tpu_custom_call.1} parent=5 // pred_region
        %s203 = ssub.s32 %s21, 1
        %s204 = sand.u32 %s34, 1
        %s205 = scalar_lea.sflag [#allocation3], %s204
        %s206 = sand.u32 %s34, 1
        %s207 = smul.addr %s206, 128
        %s208 = scalar_lea.vmem [#allocation2], %s207
        // Predicated region
        $region33: #{tpu_custom_call.1} parent=31 // pred_check
          %p209 = pneg %p47
        $region34: #{tpu_custom_call.1} parent=31 // pred_check_branch
          %211 = sbr.rel (%p209) target = $region36
        $region35: #{tpu_custom_call.1} parent=31 // pred_region
          %212 = dma.done %s205, 2048
        $region36: #{tpu_custom_call.1} parent=31 // pred_fallthru
          _
        // Predicated region
        $region37: #{tpu_custom_call.1} parent=31 // pred_check
          %p213 = pneg %p89
        $region38: #{tpu_custom_call.1} parent=31 // pred_check_branch
          %215 = sbr.rel (%p213) target = $region40
        $region39: #{tpu_custom_call.1} parent=31 // pred_region
          %216 = dma.done [#allocation6], 4096
        $region40: #{tpu_custom_call.1} parent=31 // pred_fallthru
          _
        %s217 = sand.u32 %s34, 1
        %s218 = scalar_lea.sflag [#allocation3], %s217
        %s219 = sand.u32 %s34, 1
        %s220 = smul.addr %s219, 128
        %s221 = scalar_lea.vmem [#allocation2], %s220
        %p222 = pneg %p47
        %p223 = pneg %p44
        %p224 = pneg %p68
        %p225 = pneg %p65
        %p226 = pneg %p89
        %p227 = pneg %p86
        %p228 = pneg %p115
        %p229 = pneg %p112
        %s230 = sand.u32 %s102, 1
        %s231 = scalar_lea.sflag [#allocation4], %s230
        %s232 = sand.u32 %s102, 1
        %s233 = smul.addr %s232, 128
        %s234 = scalar_lea.vmem [#allocation7], %s233
        %p235 = pneg %p141
        %p236 = pneg %p138
        %s237 = sand.u32 %s128, 1
        %s238 = scalar_lea.sflag [#allocation9], %s237
        %s239 = sand.u32 %s128, 1
        %s240 = smul.addr %s239, 128
        %s241 = scalar_lea.vmem [#allocation8], %s240
        %s242 = smul.u32 16, %s26
        %s243 = smul.u32 16, %s26
        %s244 = smul.u32 16, %s26
        %v245 = vld [vmem:[%s208] sm:$0xff]
        %v246 = vld [vmem:[%s208 + $0x8] sm:$0xff]
        %v247 = vld [vmem:[%s208 + $0x10] sm:$0xff]
        %v248 = vld [vmem:[%s208 + $0x18] sm:$0xff]
        %v249 = vld [vmem:[%s208 + $0x20] sm:$0xff]
        %v250 = vld [vmem:[%s208 + $0x28] sm:$0xff]
        %v251 = vld [vmem:[%s208 + $0x30] sm:$0xff]
        %v252 = vld [vmem:[%s208 + $0x38] sm:$0xff]
        %v253 = vld [vmem:[%s208 + $0x40] sm:$0xff]
        %v254 = vld [vmem:[%s208 + $0x48] sm:$0xff]
        %v255 = vld [vmem:[%s208 + $0x50] sm:$0xff]
        %v256 = vld [vmem:[%s208 + $0x58] sm:$0xff]
        %v257 = vld [vmem:[%s208 + $0x60] sm:$0xff]
        %v258 = vld [vmem:[%s208 + $0x68] sm:$0xff]
        %v259 = vld [vmem:[%s208 + $0x70] sm:$0xff]
        %v260 = vld [vmem:[%s208 + $0x78] sm:$0xff]
        %v261 = vlaneseq
        %v262 = vand.u32 %v261, 127
        %vm263 = vcmp.eq.s32.totalorder %v262, 64
        %v264 = vsel %vm263, 1, 0
        %v265 = vcvt.s32.f32 %v264
        %v266 = vld [vmem:[%s1] sm:$0x1]
        %v267 = vlaneseq
        %v268 = vshrl.u32 %v267, 7
        %v269 = vsub.s32 0, %v268
        %v270 = vrot.slane %v266, %v269
        %v271 = vmul.f32 %v245, %v270
        %v272 = vmul.f32 %v246, %v270
        %v273 = vmul.f32 %v247, %v270
        %v274 = vmul.f32 %v248, %v270
        %v275 = vmul.f32 %v249, %v270
        %v276 = vmul.f32 %v250, %v270
        %v277 = vmul.f32 %v251, %v270
        %v278 = vmul.f32 %v252, %v270
        %v279 = vmul.f32 %v253, %v270
        %v280 = vmul.f32 %v254, %v270
        %v281 = vmul.f32 %v255, %v270
        %v282 = vmul.f32 %v256, %v270
        %v283 = vmul.f32 %v257, %v270
        %v284 = vmul.f32 %v258, %v270
        %v285 = vmul.f32 %v259, %v270
        %v286 = vmul.f32 %v260, %v270
        %v287 = vld [vmem:[#allocation5] sm:$0xff]
        %v288 = vld [vmem:[#allocation5 + $0x8] sm:$0xff]
        %v289 = vld [vmem:[#allocation5 + $0x10] sm:$0xff]
        %v290 = vld [vmem:[#allocation5 + $0x18] sm:$0xff]
        %v291 = vld [vmem:[#allocation5 + $0x20] sm:$0xff]
        %v292 = vld [vmem:[#allocation5 + $0x28] sm:$0xff]
        %v293 = vld [vmem:[#allocation5 + $0x30] sm:$0xff]
        %v294 = vld [vmem:[#allocation5 + $0x38] sm:$0xff]
        %v295 = vld [vmem:[#allocation5 + $0x40] sm:$0xff]
        %v296 = vld [vmem:[#allocation5 + $0x48] sm:$0xff]
        %v297 = vld [vmem:[#allocation5 + $0x50] sm:$0xff]
        %v298 = vld [vmem:[#allocation5 + $0x58] sm:$0xff]
        %v299 = vld [vmem:[#allocation5 + $0x60] sm:$0xff]
        %v300 = vld [vmem:[#allocation5 + $0x68] sm:$0xff]
        %v301 = vld [vmem:[#allocation5 + $0x70] sm:$0xff]
        %v302 = vld [vmem:[#allocation5 + $0x78] sm:$0xff]
        %v303 = vadd.f32 %v271, %v265
        %v304 = vadd.f32 %v272, %v265
        %v305 = vadd.f32 %v273, %v265
        %v306 = vadd.f32 %v274, %v265
        %v307 = vadd.f32 %v275, %v265
        %v308 = vadd.f32 %v276, %v265
        %v309 = vadd.f32 %v277, %v265
        %v310 = vadd.f32 %v278, %v265
        %v311 = vadd.f32 %v279, %v265
        %v312 = vadd.f32 %v280, %v265
        %v313 = vadd.f32 %v281, %v265
        %v314 = vadd.f32 %v282, %v265
        %v315 = vadd.f32 %v283, %v265
        %v316 = vadd.f32 %v284, %v265
        %v317 = vadd.f32 %v285, %v265
        %v318 = vadd.f32 %v286, %v265
        %v319 = vpack.c.bf16 %v304, %v303
        %v320 = vpack.c.bf16 %v306, %v305
        %v321 = vpack.c.bf16 %v308, %v307
        %v322 = vpack.c.bf16 %v310, %v309
        %v323 = vpack.c.bf16 %v312, %v311
        %v324 = vpack.c.bf16 %v314, %v313
        %v325 = vpack.c.bf16 %v316, %v315
        %v326 = vpack.c.bf16 %v318, %v317
        %v335 = vunpack.c.l.b16 %v319
        %v336 = vunpack.c.h.b16 %v319
        %v337 = vunpack.c.l.b16 %v320
        %v338 = vunpack.c.h.b16 %v320
        %v339 = vunpack.c.l.b16 %v321
        %v340 = vunpack.c.h.b16 %v321
        %v341 = vunpack.c.l.b16 %v322
        %v342 = vunpack.c.h.b16 %v322
        %v343 = vunpack.c.l.b16 %v323
        %v344 = vunpack.c.h.b16 %v323
        %v345 = vunpack.c.l.b16 %v324
        %v346 = vunpack.c.h.b16 %v324
        %v347 = vunpack.c.l.b16 %v325
        %v348 = vunpack.c.h.b16 %v325
        %v349 = vunpack.c.l.b16 %v326
        %v350 = vunpack.c.h.b16 %v326
        %v351 = vpack.c.b16 %v335, %v335
        %v352 = vpack.c.b16 %v336, %v336
        %v353 = vpack.c.b16 %v337, %v337
        %v354 = vpack.c.b16 %v338, %v338
        %v355 = vpack.c.b16 %v339, %v339
        %v356 = vpack.c.b16 %v340, %v340
        %v357 = vpack.c.b16 %v341, %v341
        %v358 = vpack.c.b16 %v342, %v342
        %v359 = vpack.c.b16 %v343, %v343
        %v360 = vpack.c.b16 %v344, %v344
        %v361 = vpack.c.b16 %v345, %v345
        %v362 = vpack.c.b16 %v346, %v346
        %v363 = vpack.c.b16 %v347, %v347
        %v364 = vpack.c.b16 %v348, %v348
        %v365 = vpack.c.b16 %v349, %v349
        %v366 = vpack.c.b16 %v350, %v350
        %383 = vst [vmem:[%s234] sm:$0xf] %v351
        %384 = vst [vmem:[%s234 + $0x8] sm:$0xf] %v352
        %385 = vst [vmem:[%s234 + $0x10] sm:$0xf] %v353
        %386 = vst [vmem:[%s234 + $0x18] sm:$0xf] %v354
        %387 = vst [vmem:[%s234 + $0x20] sm:$0xf] %v355
        %388 = vst [vmem:[%s234 + $0x28] sm:$0xf] %v356
        %389 = vst [vmem:[%s234 + $0x30] sm:$0xf] %v357
        %390 = vst [vmem:[%s234 + $0x38] sm:$0xf] %v358
        %391 = vst [vmem:[%s234 + $0x40] sm:$0xf] %v359
        %392 = vst [vmem:[%s234 + $0x48] sm:$0xf] %v360
        %393 = vst [vmem:[%s234 + $0x50] sm:$0xf] %v361
        %394 = vst [vmem:[%s234 + $0x58] sm:$0xf] %v362
        %395 = vst [vmem:[%s234 + $0x60] sm:$0xf] %v363
        %396 = vst [vmem:[%s234 + $0x68] sm:$0xf] %v364
        %397 = vst [vmem:[%s234 + $0x70] sm:$0xf] %v365
        %398 = vst [vmem:[%s234 + $0x78] sm:$0xf] %v366
        %v399 = vld [vmem:[%s1 + $0x1] sm:$0x1]
        %v400 = vlaneseq
        %v401 = vshrl.u32 %v400, 7
        %v402 = vsub.s32 0, %v401
        %v403 = vrot.slane %v399, %v402
        %v404 = vmul.f32 %v245, %v403
        %v405 = vmul.f32 %v246, %v403
        %v406 = vmul.f32 %v247, %v403
        %v407 = vmul.f32 %v248, %v403
        %v408 = vmul.f32 %v249, %v403
        %v409 = vmul.f32 %v250, %v403
        %v410 = vmul.f32 %v251, %v403
        %v411 = vmul.f32 %v252, %v403
        %v412 = vmul.f32 %v253, %v403
        %v413 = vmul.f32 %v254, %v403
        %v414 = vmul.f32 %v255, %v403
        %v415 = vmul.f32 %v256, %v403
        %v416 = vmul.f32 %v257, %v403
        %v417 = vmul.f32 %v258, %v403
        %v418 = vmul.f32 %v259, %v403
        %v419 = vmul.f32 %v260, %v403
        %s420 = scalar_lea.vmem [#allocation5], 128
        %v421 = vld [vmem:[%s420] sm:$0xff]
        %v422 = vld [vmem:[%s420 + $0x8] sm:$0xff]
        %v423 = vld [vmem:[%s420 + $0x10] sm:$0xff]
        %v424 = vld [vmem:[%s420 + $0x18] sm:$0xff]
        %v425 = vld [vmem:[%s420 + $0x20] sm:$0xff]
        %v426 = vld [vmem:[%s420 + $0x28] sm:$0xff]
        %v427 = vld [vmem:[%s420 + $0x30] sm:$0xff]
        %v428 = vld [vmem:[%s420 + $0x38] sm:$0xff]
        %v429 = vld [vmem:[%s420 + $0x40] sm:$0xff]
        %v430 = vld [vmem:[%s420 + $0x48] sm:$0xff]
        %v431 = vld [vmem:[%s420 + $0x50] sm:$0xff]
        %v432 = vld [vmem:[%s420 + $0x58] sm:$0xff]
        %v433 = vld [vmem:[%s420 + $0x60] sm:$0xff]
        %v434 = vld [vmem:[%s420 + $0x68] sm:$0xff]
        %v435 = vld [vmem:[%s420 + $0x70] sm:$0xff]
        %v436 = vld [vmem:[%s420 + $0x78] sm:$0xff]
        %437 = vmatprep.subr.mxu0 0.0
        %438 = vmatpush1.msra.mxu0 %v421
        %439 = vmatprep.subr.mxu0 0.0
        %440 = vmatpush1.msra.mxu0 %v422
        %441 = vmatprep.subr.mxu0 0.0
        %442 = vmatpush1.msra.mxu0 %v423
        %443 = vmatprep.subr.mxu0 0.0
        %444 = vmatpush1.msra.mxu0 %v424
        %445 = vmatprep.subr.mxu0 0.0
        %446 = vmatpush1.msra.mxu0 %v425
        %447 = vmatprep.subr.mxu0 0.0
        %448 = vmatpush1.msra.mxu0 %v426
        %449 = vmatprep.subr.mxu0 0.0
        %450 = vmatpush1.msra.mxu0 %v427
        %451 = vmatprep.subr.mxu0 0.0
        %452 = vmatpush1.msra.mxu0 %v428
        %453 = vmatprep.subr.mxu0 0.0
        %454 = vmatpush1.msra.mxu0 %v429
        %455 = vmatprep.subr.mxu0 0.0
        %456 = vmatpush1.msra.mxu0 %v430
        %457 = vmatprep.subr.mxu0 0.0
        %458 = vmatpush1.msra.mxu0 %v431
        %459 = vmatprep.subr.mxu0 0.0
        %460 = vmatpush1.msra.mxu0 %v432
        %461 = vmatprep.subr.mxu0 0.0
        %462 = vmatpush1.msra.mxu0 %v433
        %463 = vmatprep.subr.mxu0 0.0
        %464 = vmatpush1.msra.mxu0 %v434
        %465 = vmatprep.subr.mxu0 0.0
        %466 = vmatpush1.msra.mxu0 %v435
        %467 = vmatprep.subr.mxu0 0.0
        %468 = vmatpush1.msra.mxu0 %v436
        %469 = vmatprep.subr.mxu0 0.0
        %470 = vmatpush1.msra.mxu0 0.0
        %471 = vmatprep.subr.mxu0 0.0
        %472 = vmatpush1.msra.mxu0 0.0
        %473 = vmatprep.subr.mxu0 0.0
        %474 = vmatpush1.msra.mxu0 0.0
        %475 = vmatprep.subr.mxu0 0.0
        %476 = vmatpush1.msra.mxu0 0.0
        %477 = vmatprep.subr.mxu0 0.0
        %478 = vmatpush1.msra.mxu0 0.0
        %479 = vmatprep.subr.mxu0 0.0
        %480 = vmatpush1.msra.mxu0 0.0
        %481 = vmatprep.subr.mxu0 0.0
        %482 = vmatpush1.msra.mxu0 0.0
        %483 = vmatprep.subr.mxu0 0.0
        %484 = vmatpush1.msra.mxu0 0.0
        %485 = vmatprep.subr.mxu0 0.0
        %486 = vmatpush1.msra.mxu0 0.0
        %487 = vmatprep.subr.mxu0 0.0
        %488 = vmatpush1.msra.mxu0 0.0
        %489 = vmatprep.subr.mxu0 0.0
        %490 = vmatpush1.msra.mxu0 0.0
        %491 = vmatprep.subr.mxu0 0.0
        %492 = vmatpush1.msra.mxu0 0.0
        %493 = vmatprep.subr.mxu0 0.0
        %494 = vmatpush1.msra.mxu0 0.0
        %495 = vmatprep.subr.mxu0 0.0
        %496 = vmatpush1.msra.mxu0 0.0
        %497 = vmatprep.subr.mxu0 0.0
        %498 = vmatpush1.msra.mxu0 0.0
        %499 = vmatprep.subr.mxu0 0.0
        %500 = vmatpush1.msra.mxu0 0.0
        %501 = vmatprep.mubr.f32.mxu0 0.0
        %502 = vmatmul.mubr.f32.gmra.mrb[0].mxu0 %v404
        %v503 = vpop.f32.mrb[0].mxu0
        %v504 = vadd.f32 0.0, %v503
        %v505 = vpop.f32.mrb[0].mxu0
        %506 = vmatprep.mubr.f32.mxu0 0.0
        %507 = vmatmul.mubr.f32.gmra.mrb[0].mxu0 %v405
        %v508 = vpop.f32.mrb[0].mxu0
        %v509 = vadd.f32 0.0, %v508
        %v510 = vpop.f32.mrb[0].mxu0
        %511 = vmatprep.mubr.f32.mxu0 0.0
        %512 = vmatmul.mubr.f32.gmra.mrb[0].mxu0 %v406
        %v513 = vpop.f32.mrb[0].mxu0
        %v514 = vadd.f32 0.0, %v513
        %v515 = vpop.f32.mrb[0].mxu0
        %516 = vmatprep.mubr.f32.mxu0 0.0
        %517 = vmatmul.mubr.f32.gmra.mrb[0].mxu0 %v407
        %v518 = vpop.f32.mrb[0].mxu0
        %v519 = vadd.f32 0.0, %v518
        %v520 = vpop.f32.mrb[0].mxu0
        %521 = vmatprep.mubr.f32.mxu0 0.0
        %522 = vmatmul.mubr.f32.gmra.mrb[0].mxu0 %v408
        %v523 = vpop.f32.mrb[0].mxu0
        %v524 = vadd.f32 0.0, %v523
        %v525 = vpop.f32.mrb[0].mxu0
        %526 = vmatprep.mubr.f32.mxu0 0.0
        %527 = vmatmul.mubr.f32.gmra.mrb[0].mxu0 %v409
        %v528 = vpop.f32.mrb[0].mxu0
        %v529 = vadd.f32 0.0, %v528
        %v530 = vpop.f32.mrb[0].mxu0
        %531 = vmatprep.mubr.f32.mxu0 0.0
        %532 = vmatmul.mubr.f32.gmra.mrb[0].mxu0 %v410
        %v533 = vpop.f32.mrb[0].mxu0
        %v534 = vadd.f32 0.0, %v533
        %v535 = vpop.f32.mrb[0].mxu0
        %536 = vmatprep.mubr.f32.mxu0 0.0
        %537 = vmatmul.mubr.f32.gmra.mrb[0].mxu0 %v411
        %v538 = vpop.f32.mrb[0].mxu0
        %v539 = vadd.f32 0.0, %v538
        %v540 = vpop.f32.mrb[0].mxu0
        %541 = vmatprep.mubr.f32.mxu0 0.0
        %542 = vmatmul.mubr.f32.gmra.mrb[0].mxu0 %v412
        %v543 = vpop.f32.mrb[0].mxu0
        %v544 = vadd.f32 0.0, %v543
        %v545 = vpop.f32.mrb[0].mxu0
        %546 = vmatprep.mubr.f32.mxu0 0.0
        %547 = vmatmul.mubr.f32.gmra.mrb[0].mxu0 %v413
        %v548 = vpop.f32.mrb[0].mxu0
        %v549 = vadd.f32 0.0, %v548
        %v550 = vpop.f32.mrb[0].mxu0
        %551 = vmatprep.mubr.f32.mxu0 0.0
        %552 = vmatmul.mubr.f32.gmra.mrb[0].mxu0 %v414
        %v553 = vpop.f32.mrb[0].mxu0
        %v554 = vadd.f32 0.0, %v553
        %v555 = vpop.f32.mrb[0].mxu0
        %556 = vmatprep.mubr.f32.mxu0 0.0
        %557 = vmatmul.mubr.f32.gmra.mrb[0].mxu0 %v415
        %v558 = vpop.f32.mrb[0].mxu0
        %v559 = vadd.f32 0.0, %v558
        %v560 = vpop.f32.mrb[0].mxu0
        %561 = vmatprep.mubr.f32.mxu0 0.0
        %562 = vmatmul.mubr.f32.gmra.mrb[0].mxu0 %v416
        %v563 = vpop.f32.mrb[0].mxu0
        %v564 = vadd.f32 0.0, %v563
        %v565 = vpop.f32.mrb[0].mxu0
        %566 = vmatprep.mubr.f32.mxu0 0.0
        %567 = vmatmul.mubr.f32.gmra.mrb[0].mxu0 %v417
        %v568 = vpop.f32.mrb[0].mxu0
        %v569 = vadd.f32 0.0, %v568
        %v570 = vpop.f32.mrb[0].mxu0
        %571 = vmatprep.mubr.f32.mxu0 0.0
        %572 = vmatmul.mubr.f32.gmra.mrb[0].mxu0 %v418
        %v573 = vpop.f32.mrb[0].mxu0
        %v574 = vadd.f32 0.0, %v573
        %v575 = vpop.f32.mrb[0].mxu0
        %576 = vmatprep.mubr.f32.mxu0 0.0
        %577 = vmatmul.mubr.f32.gmra.mrb[0].mxu0 %v419
        %v578 = vpop.f32.mrb[0].mxu0
        %v579 = vadd.f32 0.0, %v578
        %v580 = vpop.f32.mrb[0].mxu0
        %581 = vdwg.mxu0
        %582 = vmatprep.subr.mxu0 0.0
        %583 = vmatpush1.msra.mxu0 %v287
        %584 = vmatprep.subr.mxu0 0.0
        %585 = vmatpush1.msra.mxu0 %v288
        %586 = vmatprep.subr.mxu0 0.0
        %587 = vmatpush1.msra.mxu0 %v289
        %588 = vmatprep.subr.mxu0 0.0
        %589 = vmatpush1.msra.mxu0 %v290
        %590 = vmatprep.subr.mxu0 0.0
        %591 = vmatpush1.msra.mxu0 %v291
        %592 = vmatprep.subr.mxu0 0.0
        %593 = vmatpush1.msra.mxu0 %v292
        %594 = vmatprep.subr.mxu0 0.0
        %595 = vmatpush1.msra.mxu0 %v293
        %596 = vmatprep.subr.mxu0 0.0
        %597 = vmatpush1.msra.mxu0 %v294
        %598 = vmatprep.subr.mxu0 0.0
        %599 = vmatpush1.msra.mxu0 %v295
        %600 = vmatprep.subr.mxu0 0.0
        %601 = vmatpush1.msra.mxu0 %v296
        %602 = vmatprep.subr.mxu0 0.0
        %603 = vmatpush1.msra.mxu0 %v297
        %604 = vmatprep.subr.mxu0 0.0
        %605 = vmatpush1.msra.mxu0 %v298
        %606 = vmatprep.subr.mxu0 0.0
        %607 = vmatpush1.msra.mxu0 %v299
        %608 = vmatprep.subr.mxu0 0.0
        %609 = vmatpush1.msra.mxu0 %v300
        %610 = vmatprep.subr.mxu0 0.0
        %611 = vmatpush1.msra.mxu0 %v301
        %612 = vmatprep.subr.mxu0 0.0
        %613 = vmatpush1.msra.mxu0 %v302
        %614 = vmatprep.subr.mxu0 0.0
        %615 = vmatpush1.msra.mxu0 0.0
        %616 = vmatprep.subr.mxu0 0.0
        %617 = vmatpush1.msra.mxu0 0.0
        %618 = vmatprep.subr.mxu0 0.0
        %619 = vmatpush1.msra.mxu0 0.0
        %620 = vmatprep.subr.mxu0 0.0
        %621 = vmatpush1.msra.mxu0 0.0
        %622 = vmatprep.subr.mxu0 0.0
        %623 = vmatpush1.msra.mxu0 0.0
        %624 = vmatprep.subr.mxu0 0.0
        %625 = vmatpush1.msra.mxu0 0.0
        %626 = vmatprep.subr.mxu0 0.0
        %627 = vmatpush1.msra.mxu0 0.0
        %628 = vmatprep.subr.mxu0 0.0
        %629 = vmatpush1.msra.mxu0 0.0
        %630 = vmatprep.subr.mxu0 0.0
        %631 = vmatpush1.msra.mxu0 0.0
        %632 = vmatprep.subr.mxu0 0.0
        %633 = vmatpush1.msra.mxu0 0.0
        %634 = vmatprep.subr.mxu0 0.0
        %635 = vmatpush1.msra.mxu0 0.0
        %636 = vmatprep.subr.mxu0 0.0
        %637 = vmatpush1.msra.mxu0 0.0
        %638 = vmatprep.subr.mxu0 0.0
        %639 = vmatpush1.msra.mxu0 0.0
        %640 = vmatprep.subr.mxu0 0.0
        %641 = vmatpush1.msra.mxu0 0.0
        %642 = vmatprep.subr.mxu0 0.0
        %643 = vmatpush1.msra.mxu0 0.0
        %644 = vmatprep.subr.mxu0 0.0
        %645 = vmatpush1.msra.mxu0 0.0
        %646 = vmatprep.mubr.f32.mxu0 0.0
        %647 = vmatmul.mubr.f32.gmra.mrb[0].mxu0 %v271
        %v648 = vpop.f32.mrb[0].mxu0
        %v649 = vadd.f32 %v504, %v648
        %v650 = vpop.f32.mrb[0].mxu0
        %651 = vmatprep.mubr.f32.mxu0 0.0
        %652 = vmatmul.mubr.f32.gmra.mrb[0].mxu0 %v272
        %v653 = vpop.f32.mrb[0].mxu0
        %v654 = vadd.f32 %v509, %v653
        %v655 = vpop.f32.mrb[0].mxu0
        %656 = vmatprep.mubr.f32.mxu0 0.0
        %657 = vmatmul.mubr.f32.gmra.mrb[0].mxu0 %v273
        %v658 = vpop.f32.mrb[0].mxu0
        %v659 = vadd.f32 %v514, %v658
        %v660 = vpop.f32.mrb[0].mxu0
        %661 = vmatprep.mubr.f32.mxu0 0.0
        %662 = vmatmul.mubr.f32.gmra.mrb[0].mxu0 %v274
        %v663 = vpop.f32.mrb[0].mxu0
        %v664 = vadd.f32 %v519, %v663
        %v665 = vpop.f32.mrb[0].mxu0
        %666 = vmatprep.mubr.f32.mxu0 0.0
        %667 = vmatmul.mubr.f32.gmra.mrb[0].mxu0 %v275
        %v668 = vpop.f32.mrb[0].mxu0
        %v669 = vadd.f32 %v524, %v668
        %v670 = vpop.f32.mrb[0].mxu0
        %671 = vmatprep.mubr.f32.mxu0 0.0
        %672 = vmatmul.mubr.f32.gmra.mrb[0].mxu0 %v276
        %v673 = vpop.f32.mrb[0].mxu0
        %v674 = vadd.f32 %v529, %v673
        %v675 = vpop.f32.mrb[0].mxu0
        %676 = vmatprep.mubr.f32.mxu0 0.0
        %677 = vmatmul.mubr.f32.gmra.mrb[0].mxu0 %v277
        %v678 = vpop.f32.mrb[0].mxu0
        %v679 = vadd.f32 %v534, %v678
        %v680 = vpop.f32.mrb[0].mxu0
        %681 = vmatprep.mubr.f32.mxu0 0.0
        %682 = vmatmul.mubr.f32.gmra.mrb[0].mxu0 %v278
        %v683 = vpop.f32.mrb[0].mxu0
        %v684 = vadd.f32 %v539, %v683
        %v685 = vpop.f32.mrb[0].mxu0
        %686 = vmatprep.mubr.f32.mxu0 0.0
        %687 = vmatmul.mubr.f32.gmra.mrb[0].mxu0 %v279
        %v688 = vpop.f32.mrb[0].mxu0
        %v689 = vadd.f32 %v544, %v688
        %v690 = vpop.f32.mrb[0].mxu0
        %691 = vmatprep.mubr.f32.mxu0 0.0
        %692 = vmatmul.mubr.f32.gmra.mrb[0].mxu0 %v280
        %v693 = vpop.f32.mrb[0].mxu0
        %v694 = vadd.f32 %v549, %v693
        %v695 = vpop.f32.mrb[0].mxu0
        %696 = vmatprep.mubr.f32.mxu0 0.0
        %697 = vmatmul.mubr.f32.gmra.mrb[0].mxu0 %v281
        %v698 = vpop.f32.mrb[0].mxu0
        %v699 = vadd.f32 %v554, %v698
        %v700 = vpop.f32.mrb[0].mxu0
        %701 = vmatprep.mubr.f32.mxu0 0.0
        %702 = vmatmul.mubr.f32.gmra.mrb[0].mxu0 %v282
        %v703 = vpop.f32.mrb[0].mxu0
        %v704 = vadd.f32 %v559, %v703
        %v705 = vpop.f32.mrb[0].mxu0
        %706 = vmatprep.mubr.f32.mxu0 0.0
        %707 = vmatmul.mubr.f32.gmra.mrb[0].mxu0 %v283
        %v708 = vpop.f32.mrb[0].mxu0
        %v709 = vadd.f32 %v564, %v708
        %v710 = vpop.f32.mrb[0].mxu0
        %711 = vmatprep.mubr.f32.mxu0 0.0
        %712 = vmatmul.mubr.f32.gmra.mrb[0].mxu0 %v284
        %v713 = vpop.f32.mrb[0].mxu0
        %v714 = vadd.f32 %v569, %v713
        %v715 = vpop.f32.mrb[0].mxu0
        %716 = vmatprep.mubr.f32.mxu0 0.0
        %717 = vmatmul.mubr.f32.gmra.mrb[0].mxu0 %v285
        %v718 = vpop.f32.mrb[0].mxu0
        %v719 = vadd.f32 %v574, %v718
        %v720 = vpop.f32.mrb[0].mxu0
        %721 = vmatprep.mubr.f32.mxu0 0.0
        %722 = vmatmul.mubr.f32.gmra.mrb[0].mxu0 %v286
        %v723 = vpop.f32.mrb[0].mxu0
        %v724 = vadd.f32 %v579, %v723
        %v725 = vpop.f32.mrb[0].mxu0
        %726 = vdwg.mxu0
        %v727 = vadd.f32 %v404, %v265
        %v728 = vadd.f32 %v405, %v265
        %v729 = vadd.f32 %v406, %v265
        %v730 = vadd.f32 %v407, %v265
        %v731 = vadd.f32 %v408, %v265
        %v732 = vadd.f32 %v409, %v265
        %v733 = vadd.f32 %v410, %v265
        %v734 = vadd.f32 %v411, %v265
        %v735 = vadd.f32 %v412, %v265
        %v736 = vadd.f32 %v413, %v265
        %v737 = vadd.f32 %v414, %v265
        %v738 = vadd.f32 %v415, %v265
        %v739 = vadd.f32 %v416, %v265
        %v740 = vadd.f32 %v417, %v265
        %v741 = vadd.f32 %v418, %v265
        %v742 = vadd.f32 %v419, %v265
        %v743 = vpack.c.bf16 %v728, %v727
        %v744 = vpack.c.bf16 %v730, %v729
        %v745 = vpack.c.bf16 %v732, %v731
        %v746 = vpack.c.bf16 %v734, %v733
        %v747 = vpack.c.bf16 %v736, %v735
        %v748 = vpack.c.bf16 %v738, %v737
        %v749 = vpack.c.bf16 %v740, %v739
        %v750 = vpack.c.bf16 %v742, %v741
        %v759 = vunpack.c.l.b16 %v743
        %v760 = vunpack.c.h.b16 %v743
        %v761 = vunpack.c.l.b16 %v744
        %v762 = vunpack.c.h.b16 %v744
        %v763 = vunpack.c.l.b16 %v745
        %v764 = vunpack.c.h.b16 %v745
        %v765 = vunpack.c.l.b16 %v746
        %v766 = vunpack.c.h.b16 %v746
        %v767 = vunpack.c.l.b16 %v747
        %v768 = vunpack.c.h.b16 %v747
        %v769 = vunpack.c.l.b16 %v748
        %v770 = vunpack.c.h.b16 %v748
        %v771 = vunpack.c.l.b16 %v749
        %v772 = vunpack.c.h.b16 %v749
        %v773 = vunpack.c.l.b16 %v750
        %v774 = vunpack.c.h.b16 %v750
        %v775 = vpack.c.b16 %v759, %v759
        %v776 = vpack.c.b16 %v760, %v760
        %v777 = vpack.c.b16 %v761, %v761
        %v778 = vpack.c.b16 %v762, %v762
        %v779 = vpack.c.b16 %v763, %v763
        %v780 = vpack.c.b16 %v764, %v764
        %v781 = vpack.c.b16 %v765, %v765
        %v782 = vpack.c.b16 %v766, %v766
        %v783 = vpack.c.b16 %v767, %v767
        %v784 = vpack.c.b16 %v768, %v768
        %v785 = vpack.c.b16 %v769, %v769
        %v786 = vpack.c.b16 %v770, %v770
        %v787 = vpack.c.b16 %v771, %v771
        %v788 = vpack.c.b16 %v772, %v772
        %v789 = vpack.c.b16 %v773, %v773
        %v790 = vpack.c.b16 %v774, %v774
        %807 = vst [vmem:[%s234 + $0x4] sm:$0xf] %v775
        %808 = vst [vmem:[%s234 + $0xc] sm:$0xf] %v776
        %809 = vst [vmem:[%s234 + $0x14] sm:$0xf] %v777
        %810 = vst [vmem:[%s234 + $0x1c] sm:$0xf] %v778
        %811 = vst [vmem:[%s234 + $0x24] sm:$0xf] %v779
        %812 = vst [vmem:[%s234 + $0x2c] sm:$0xf] %v780
        %813 = vst [vmem:[%s234 + $0x34] sm:$0xf] %v781
        %814 = vst [vmem:[%s234 + $0x3c] sm:$0xf] %v782
        %815 = vst [vmem:[%s234 + $0x44] sm:$0xf] %v783
        %816 = vst [vmem:[%s234 + $0x4c] sm:$0xf] %v784
        %817 = vst [vmem:[%s234 + $0x54] sm:$0xf] %v785
        %818 = vst [vmem:[%s234 + $0x5c] sm:$0xf] %v786
        %819 = vst [vmem:[%s234 + $0x64] sm:$0xf] %v787
        %820 = vst [vmem:[%s234 + $0x6c] sm:$0xf] %v788
        %821 = vst [vmem:[%s234 + $0x74] sm:$0xf] %v789
        %822 = vst [vmem:[%s234 + $0x7c] sm:$0xf] %v790
        %823 = vst [vmem:[%s241] sm:$0xff] %v649
        %824 = vst [vmem:[%s241 + $0x8] sm:$0xff] %v654
        %825 = vst [vmem:[%s241 + $0x10] sm:$0xff] %v659
        %826 = vst [vmem:[%s241 + $0x18] sm:$0xff] %v664
        %827 = vst [vmem:[%s241 + $0x20] sm:$0xff] %v669
        %828 = vst [vmem:[%s241 + $0x28] sm:$0xff] %v674
        %829 = vst [vmem:[%s241 + $0x30] sm:$0xff] %v679
        %830 = vst [vmem:[%s241 + $0x38] sm:$0xff] %v684
        %831 = vst [vmem:[%s241 + $0x40] sm:$0xff] %v689
        %832 = vst [vmem:[%s241 + $0x48] sm:$0xff] %v694
        %833 = vst [vmem:[%s241 + $0x50] sm:$0xff] %v699
        %834 = vst [vmem:[%s241 + $0x58] sm:$0xff] %v704
        %835 = vst [vmem:[%s241 + $0x60] sm:$0xff] %v709
        %836 = vst [vmem:[%s241 + $0x68] sm:$0xff] %v714
        %837 = vst [vmem:[%s241 + $0x70] sm:$0xff] %v719
        %838 = vst [vmem:[%s241 + $0x78] sm:$0xff] %v724
        %s839 = sand.u32 %s102, 1
        %s840 = scalar_lea.sflag [#allocation4], %s839
        %s841 = sand.u32 %s102, 1
        %s842 = smul.addr %s841, 128
        %s843 = scalar_lea.vmem [#allocation7], %s842
        %s844 = sand.u32 %s128, 1
        %s845 = scalar_lea.sflag [#allocation9], %s844
        %s846 = sand.u32 %s128, 1
        %s847 = smul.addr %s846, 128
        %s848 = scalar_lea.vmem [#allocation8], %s847
        // Predicated region
        $region41: #{tpu_custom_call.1} parent=31 // pred_check
          %p849 = pneg %p112
        $region42: #{tpu_custom_call.1} parent=31 // pred_check_branch
          %851 = sbr.rel (%p849) target = $region44
        $region43: #{tpu_custom_call.1} parent=31 // pred_region
          %s852 = smul.u32 16, %s26
          %s854 = ssub.s32 2048, 2048
          %855 = vsyncadd %s840, %s854
          %s856 = smul.addr %s852, 2
          %s857 = smul.addr %s856, 64
          %s858 = scalar_lea.hbm %s3, %s857
          %s859 = sshll.u32 %s843, 4
          %s860 = int_to_ptr.vmem [resolvable:$true] %s859
          %865 = dma.vmem_to_hbm [thread:$0]  %s860, 2048, %s858, %s840, 128, 128, 8
        $region44: #{tpu_custom_call.1} parent=31 // pred_fallthru
          _
        // Predicated region
        $region45: #{tpu_custom_call.1} parent=31 // pred_check
          %p866 = pneg %p138
        $region46: #{tpu_custom_call.1} parent=31 // pred_check_branch
          %868 = sbr.rel (%p866) target = $region48
        $region47: #{tpu_custom_call.1} parent=31 // pred_region
          %s869 = smul.u32 16, %s26
          %s871 = ssub.s32 2048, 2048
          %872 = vsyncadd %s845, %s871
          %s873 = smul.addr %s869, 128
          %s874 = scalar_lea.hbm %s4, %s873
          %s875 = sshll.u32 %s848, 4
          %s876 = int_to_ptr.vmem [resolvable:$true] %s875
          %881 = dma.vmem_to_hbm [thread:$0]  %s876, 2048, %s874, %s845, 128, 128, 8
        $region48: #{tpu_custom_call.1} parent=31 // pred_fallthru
          _
      $region32: #{tpu_custom_call.1} parent=5 // pred_fallthru
        _
      %p882 = scmp.le.s32.totalorder 2, %s21
      // Predicated region
      $region49: #{tpu_custom_call.1} parent=5 // pred_check
        %p883 = pneg %p882
      $region50: #{tpu_custom_call.1} parent=5 // pred_check_branch
        %885 = sbr.rel (%p883) target = $region52
      $region51: #{tpu_custom_call.1} parent=5 // pred_region
        %s886 = ssub.s32 %s21, 2
        // Predicated region
        $region53: #{tpu_custom_call.1} parent=51 // pred_check
          %p887 = pneg %p118
        $region54: #{tpu_custom_call.1} parent=51 // pred_check_branch
          %889 = sbr.rel (%p887) target = $region56
        $region55: #{tpu_custom_call.1} parent=51 // pred_region
          %s890 = sand.u32 %s103, 1
          %s891 = scalar_lea.sflag [#allocation4], %s890
          %s892 = sand.u32 %s103, 1
          %s893 = smul.addr %s892, 128
          %s894 = scalar_lea.vmem [#allocation7], %s893
          %895 = dma.done %s891, 2048
        $region56: #{tpu_custom_call.1} parent=51 // pred_fallthru
          _
        // Predicated region
        $region57: #{tpu_custom_call.1} parent=51 // pred_check
          %p896 = pneg %p144
        $region58: #{tpu_custom_call.1} parent=51 // pred_check_branch
          %898 = sbr.rel (%p896) target = $region60
        $region59: #{tpu_custom_call.1} parent=51 // pred_region
          %s899 = sand.u32 %s129, 1
          %s900 = scalar_lea.sflag [#allocation9], %s899
          %s901 = sand.u32 %s129, 1
          %s902 = smul.addr %s901, 128
          %s903 = scalar_lea.vmem [#allocation8], %s902
          %904 = dma.done %s900, 2048
        $region60: #{tpu_custom_call.1} parent=51 // pred_fallthru
          _
      $region52: #{tpu_custom_call.1} parent=5 // pred_fallthru
        _
    $region6: #{tpu_custom_call.1} parent=1 // loop_footer
      %s25 = sadd.s32 1, %s21
    $region7: #{tpu_custom_call.1} parent=1 // loop_footer_branch
      %20 = sbr.rel target = $region3
    $region8: #{tpu_custom_call.1} parent=1 // loop_exit
      _
    %905 = vsyncpa [#allocation3], 1
    %s906 = scalar_lea.sflag [#allocation3], 1
    %907 = vsyncpa %s906, 1
    %908 = vsyncpa [#allocation6], 1
    %909 = vsyncpa [#allocation4], 1
    %s910 = scalar_lea.sflag [#allocation4], 1
    %911 = vsyncpa %s910, 1
    %912 = vsyncpa [#allocation9], 1
    %s913 = scalar_lea.sflag [#allocation9], 1
    %914 = vsyncpa %s913, 1

</llo_original>
